<compile_context>
chip_gen: v5e
topology: v5e:2x2
jax: 0.10.0
libtpu: 0.0.40
codegen_flags: <defaults>
</compile_context>

<pallas_src>
import functools

import jax
import jax.numpy as jnp
from jax.experimental import pallas as pl
from jax.experimental.pallas import tpu as pltpu


def _set_criterion_kernel(*refs, weights, smoothing, num_classes, num_stages,
                          batch, block_rows, needs_mask):
    """One grid step = one batch tile: all stages' weighted (label-smooth) CE partial."""
    t_ref = refs[0]                                   # resident (padded_batch, 1) int32
    logit_refs = refs[1:1 + num_stages]               # per-stage (tb, C) native dtype
    out_ref = refs[1 + num_stages]                    # (8, 128) f32 partial slab

    tb = block_rows
    c = num_classes
    i = pl.program_id(0)

    # Targets for this tile, sliced out of the single resident block.
    if t_ref.shape[0] == tb:                          # nbt == 1: take the whole block
        tgt = t_ref[...]
    else:                                             # tb is a multiple of 8 here
        start = pl.multiple_of(i * tb, 8)
        tgt = t_ref[pl.ds(start, tb), :]

    col = jax.lax.broadcasted_iota(jnp.int32, (tb, c), 1)
    is_tgt = col == tgt                               # (tb, C) bool, shared by all stages

    off = (smoothing / (c - 1.0)) if (smoothing > 0.0 and c > 1) else 0.0

    def stage_row_loss(x_ref):
        # Consume this stage's (tb, C) f32 block into (tb, 1) row scalars.
        x = x_ref[...].astype(jnp.float32)
        m = jnp.max(x, axis=-1, keepdims=True)
        lse = jnp.log(jnp.sum(jnp.exp(x - m), axis=-1, keepdims=True)) + m
        x_t = jnp.sum(jnp.where(is_tgt, x, 0.0), axis=-1, keepdims=True)
        if smoothing == 0.0:
            # Plain CE: no logp / one-hot / weight tensors materialised.
            return lse - x_t
        sum_x = jnp.sum(x, axis=-1, keepdims=True)
        return (1.0 - smoothing - off) * (lse - x_t) + off * (c * lse - sum_x)

    acc = jnp.zeros((tb, 1), jnp.float32)
    for s in range(num_stages):                       # static, unrolled
        acc = acc + weights[s] * stage_row_loss(logit_refs[s])

    if needs_mask:
        # Last (remainder) tile: zero out rows beyond the real batch.  A plain
        # where (not a multiply) so garbage/NaN in the stale region cannot leak.
        row = jax.lax.broadcasted_iota(jnp.int32, (tb, 1), 0)
        acc = jnp.where(row + i * tb < batch, acc, 0.0)

    total = jnp.sum(acc)                              # per-tile scalar partial

    # Broadcast the partial over the whole (8, 128) slab: fully unmasked
    # lane-dense store, no iota/compare/select epilogue.  Wrapper divides by 1024.
    out_ref[...] = jnp.full((8, 128), total, dtype=jnp.float32)


def _vmem_capacity_bytes(default=64 << 20):
    """Physical VMEM per TensorCore (falls back to the conservative v7x value)."""
    try:
        return int(pltpu.get_tpu_info().vmem_capacity_bytes)
    except Exception:
        return default


def _pick_batch_tile(batch, per_row_bytes, budget_bytes, target_rows=512, min_steps=4):
    """Batch-tile size: multiple of 8, <= target, fits VMEM budget, >= min_steps grid steps."""
    if batch <= 8:
        return batch                                   # single block equal to the full batch
    # Largest multiple-of-8 tile within the VMEM budget.
    tb_budget = max(8, (budget_bytes // max(per_row_bytes, 1)) // 8 * 8)
    # Keep >= min_steps grid steps so the DMA pipeline (and v7x's 2nd TC) overlaps.
    tb_steps = max(8, (batch // min_steps) // 8 * 8)
    # Never larger than the 8-aligned batch (remainder handled by a masked last tile).
    tb_batch = max(8, (batch // 8) * 8)
    return min(target_rows, tb_budget, tb_steps, tb_batch)


def set_criterion_forward(outputs, targets, *, loss_gamma=0.5, loss_choice="decay",
                          smooth_labels=False, smoothing=0.0):
    """JAX/Pallas port of SetCriterion.forward."""
    if not isinstance(outputs, (list, tuple)):
        outputs = [outputs]
    outputs = list(outputs)
    num_stages = len(outputs)
    batch, num_classes = outputs[0].shape

    # Per-stage weights, matching the PyTorch loop ordering:
    #   outputs[-1] -> 1.0 ; outputs[-(s+1)] -> gamma**s ('decay') or gamma ('weighted')
    weights = [0.0] * num_stages
    weights[num_stages - 1] = 1.0
    weight_sum = 1.0
    if num_stages > 1 and loss_gamma > 0:
        for s in range(1, num_stages):
            w = (loss_gamma ** s) if loss_choice == "decay" else loss_gamma
            weights[num_stages - 1 - s] = w
            weight_sum += w

    # Drop zero-weight stages entirely: never DMA'd, never computed.
    active = [(o, w) for o, w in zip(outputs, weights) if w != 0.0]
    act_outputs = [o for o, _ in active]
    act_weights = tuple(float(w) for _, w in active)
    n_active = len(act_outputs)

    smoothing_val = float(smoothing) if smooth_labels else 0.0

    itemsize = jnp.dtype(act_outputs[0].dtype).itemsize
    # Per batch row: double-buffered native-dtype inputs (2*itemsize per stage elem)
    # plus ~1.5 f32 temporaries per stage elem (astype copy + exp/where intermediates
    # of the unrolled stage loop), plus the resident targets.
    per_row_bytes = n_active * num_classes * (2 * itemsize + 6) + 16

    vmem_cap = _vmem_capacity_bytes()
    tile_budget = min(24 << 20, vmem_cap // 3)
    vmem_limit = max(32 << 20, min((vmem_cap * 3) // 4, 100 << 20))

    tb = _pick_batch_tile(batch, per_row_bytes, tile_budget)
    nbt = pl.cdiv(batch, tb)
    needs_mask = (batch % tb) != 0

    # Targets: one resident int32 VMEM block for the whole grid (no per-step DMA).
    # Padded to nbt*tb rows so the in-kernel dynamic slice is always in bounds.
    padded_batch = nbt * tb
    tgt = targets.astype(jnp.int32).reshape(batch, 1)
    if padded_batch != batch:
        tgt = jnp.pad(tgt, ((0, padded_batch - batch), (0, 0)))

    kernel = functools.partial(
        _set_criterion_kernel,
        weights=act_weights, smoothing=smoothing_val,
        num_classes=num_classes, num_stages=n_active,
        batch=batch, block_rows=tb, needs_mask=needs_mask)

    in_specs = ([pl.BlockSpec((padded_batch, 1), lambda i: (0, 0))]           # resident targets
                + [pl.BlockSpec((tb, num_classes), lambda i: (i, 0))          # per-stage logits
                   for _ in range(n_active)])

    cost = pl.CostEstimate(
        flops=int(6 * n_active * batch * num_classes),
        transcendentals=int(n_active * batch * num_classes),
        bytes_accessed=int(n_active * batch * num_classes * itemsize
                           + padded_batch * 4 + nbt * 8 * 128 * 4))

    partials = pl.pallas_call(
        kernel,
        out_shape=jax.ShapeDtypeStruct((nbt, 8, 128), jnp.float32),
        grid=(nbt,),
        in_specs=in_specs,
        out_specs=pl.BlockSpec((None, 8, 128), lambda i: (i, 0, 0)),
        compiler_params=pltpu.CompilerParams(
            dimension_semantics=("parallel",),
            vmem_limit_bytes=int(vmem_limit)),
        cost_estimate=cost,
    )(tgt, *act_outputs)

    # Each tile's partial is replicated across its (8, 128) slab -> divide by 1024.
    loss = jnp.sum(partials) / jnp.float32(1024.0 * batch * weight_sum)
    return {"loss_labels": loss}


def _reference_loss(outputs, targets, *, loss_gamma, loss_choice, smooth_labels, smoothing):
    """Plain-JAX reference mirroring the PyTorch SetCriterion forward."""
    def one_stage(logits, t):
        logp = jax.nn.log_softmax(logits.astype(jnp.float32), axis=-1)
        c = logits.shape[-1]
        if smooth_labels:
            oh = jax.nn.one_hot(t, c, dtype=jnp.float32)
            off = smoothing / (c - 1.0)
            w = oh * (1.0 - smoothing) + (1.0 - oh) * off
            return jnp.mean(-jnp.sum(w * logp, axis=-1))
        return jnp.mean(-jnp.take_along_axis(logp, t[:, None], axis=-1))

    loss = one_stage(outputs[-1], targets)
    weight_sum = 1.0
    if len(outputs) > 1 and loss_gamma > 0:
        for s in range(1, len(outputs)):
            w = (loss_gamma ** s) if loss_choice == "decay" else loss_gamma
            weight_sum += w
            loss = loss + w * one_stage(outputs[-(s + 1)], targets)
    return loss / weight_sum


if __name__ == "__main__":
    key = jax.random.PRNGKey(0)

    # Case 1: CrossEntropy, 'decay' weighting. batch=36 (not a multiple of 8) so the
    # grid has 5 steps with a masked remainder tile; C=40 exercises non-128 lanes.
    S, B, C = 3, 36, 40
    k1, k2, k3, k4 = jax.random.split(key, 4)
    outputs = [jax.random.normal(jax.random.fold_in(k1, s), (B, C), dtype=jnp.float32)
               for s in range(S)]
    targets = jax.random.randint(k2, (B,), 0, C, dtype=jnp.int32)

    got = set_criterion_forward(outputs, targets, loss_gamma=0.5, loss_choice="decay",
                                smooth_labels=False, smoothing=0.0)["loss_labels"]
    got = jax.block_until_ready(got)
    ref = jax.block_until_ready(_reference_loss(
        outputs, targets, loss_gamma=0.5, loss_choice="decay",
        smooth_labels=False, smoothing=0.0))
    assert jnp.allclose(got, ref, atol=2e-5, rtol=2e-5), (got, ref)

    # Case 2: LabelSmoothLoss, 'weighted' weighting (same tensors).
    got2 = set_criterion_forward(outputs, targets, loss_gamma=0.5, loss_choice="weighted",
                                 smooth_labels=True, smoothing=0.1)["loss_labels"]
    got2 = jax.block_until_ready(got2)
    ref2 = jax.block_until_ready(_reference_loss(
        outputs, targets, loss_gamma=0.5, loss_choice="weighted",
        smooth_labels=True, smoothing=0.1))
    assert jnp.allclose(got2, ref2, atol=2e-5, rtol=2e-5), (got2, ref2)

    # Case 3: bf16 logits, num_classes not a multiple of 128, masked remainder tile.
    S3, B3, C3 = 2, 20, 130
    outputs3 = [jax.random.normal(jax.random.fold_in(k3, s), (B3, C3),
                                  dtype=jnp.float32).astype(jnp.bfloat16)
                for s in range(S3)]
    targets3 = jax.random.randint(k4, (B3,), 0, C3, dtype=jnp.int32)
    got3 = set_criterion_forward(outputs3, targets3, loss_gamma=0.5, loss_choice="decay",
                                 smooth_labels=False, smoothing=0.0)["loss_labels"]
    got3 = jax.block_until_ready(got3)
    ref3 = jax.block_until_ready(_reference_loss(
        outputs3, targets3, loss_gamma=0.5, loss_choice="decay",
        smooth_labels=False, smoothing=0.0))
    assert jnp.allclose(got3, ref3, atol=5e-5, rtol=5e-5), (got3, ref3)

    print("KERNEL_OK")
</pallas_src>

<mosaic_0001>
module attributes {stable_mosaic.version = 11 : i64} {
  func.func @_set_criterion_kernel(%arg0: i32, %arg1: memref<40x1xi32, #tpu.memory_space<vmem>>, %arg2: memref<8x40xf32, #tpu.memory_space<vmem>>, %arg3: memref<8x40xf32, #tpu.memory_space<vmem>>, %arg4: memref<8x40xf32, #tpu.memory_space<vmem>>, %arg5: memref<1x8x128xf32, #tpu.memory_space<vmem>>) attributes {dimension_semantics = [#tpu.dimension_semantics<parallel>], iteration_bounds = array<i64: 5>, scalar_prefetch = 0 : i64, scratch_operands = 0 : i64, tpu.core_type = #tpu.core_type<tc>, window_params = [{pipeline_mode = #tpu.pipeline_mode<synchronous>, transform_indices = @transform_0, window_bounds = array<i64: 40, 1>}, {transform_indices = @transform_1, window_bounds = array<i64: 8, 40>}, {transform_indices = @transform_2, window_bounds = array<i64: 8, 40>}, {transform_indices = @transform_3, window_bounds = array<i64: 8, 40>}, {transform_indices = @transform_4, window_bounds = array<i64: 1, 8, 128>}]} {
    %c8_i32 = arith.constant 8 : i32
    %0 = arith.muli %arg0, %c8_i32 : i32
    %1 = tpu.assume_multiple %0, 8 : i32
    %2 = arith.index_cast %1 : i32 to index
    %c0 = arith.constant 0 : index
    %3 = vector.load %arg1[%2, %c0] : memref<40x1xi32, #tpu.memory_space<vmem>>, vector<8x1xi32>
    %4 = tpu.iota {dimensions = array<i32: 1>} : vector<8x40xi32>
    %5 = vector.broadcast %3 : vector<8x1xi32> to vector<8x40xi32>
    %6 = arith.cmpi eq, %4, %5 : vector<8x40xi32>
    %cst = arith.constant 0.000000e+00 : f32
    %7 = vector.broadcast %cst : f32 to vector<8x1xf32>
    %c0_0 = arith.constant 0 : index
    %c0_1 = arith.constant 0 : index
    %8 = vector.load %arg2[%c0_0, %c0_1] : memref<8x40xf32, #tpu.memory_space<vmem>>, vector<8x40xf32>
    %cst_2 = arith.constant dense<0xFF800000> : vector<8xf32>
    %9 = vector.multi_reduction <maximumf>, %8, %cst_2 [1] : vector<8x40xf32> to vector<8xf32>
    %10 = vector.shape_cast %9 : vector<8xf32> to vector<8x1xf32>
    %11 = vector.broadcast %10 : vector<8x1xf32> to vector<8x40xf32>
    %12 = arith.subf %8, %11 : vector<8x40xf32>
    %13 = math.exp %12 : vector<8x40xf32>
    %cst_3 = arith.constant dense<0.000000e+00> : vector<8xf32>
    %14 = vector.multi_reduction <add>, %13, %cst_3 [1] : vector<8x40xf32> to vector<8xf32>
    %15 = vector.shape_cast %14 : vector<8xf32> to vector<8x1xf32>
    %16 = math.log %15 : vector<8x1xf32>
    %17 = arith.addf %16, %10 : vector<8x1xf32>
    %cst_4 = arith.constant 0.000000e+00 : f32
    %18 = vector.broadcast %cst_4 : f32 to vector<8x40xf32>
    %19 = arith.select %6, %8, %18 : vector<8x40xi1>, vector<8x40xf32>
    %cst_5 = arith.constant dense<0.000000e+00> : vector<8xf32>
    %20 = vector.multi_reduction <add>, %19, %cst_5 [1] : vector<8x40xf32> to vector<8xf32>
    %21 = vector.shape_cast %20 : vector<8xf32> to vector<8x1xf32>
    %22 = arith.subf %17, %21 : vector<8x1xf32>
    %cst_6 = arith.constant 2.500000e-01 : f32
    %23 = vector.broadcast %cst_6 : f32 to vector<8x1xf32>
    %24 = arith.mulf %23, %22 : vector<8x1xf32>
    %25 = arith.addf %7, %24 : vector<8x1xf32>
    %c0_7 = arith.constant 0 : index
    %c0_8 = arith.constant 0 : index
    %26 = vector.load %arg3[%c0_7, %c0_8] : memref<8x40xf32, #tpu.memory_space<vmem>>, vector<8x40xf32>
    %cst_9 = arith.constant dense<0xFF800000> : vector<8xf32>
    %27 = vector.multi_reduction <maximumf>, %26, %cst_9 [1] : vector<8x40xf32> to vector<8xf32>
    %28 = vector.shape_cast %27 : vector<8xf32> to vector<8x1xf32>
    %29 = vector.broadcast %28 : vector<8x1xf32> to vector<8x40xf32>
    %30 = arith.subf %26, %29 : vector<8x40xf32>
    %31 = math.exp %30 : vector<8x40xf32>
    %cst_10 = arith.constant dense<0.000000e+00> : vector<8xf32>
    %32 = vector.multi_reduction <add>, %31, %cst_10 [1] : vector<8x40xf32> to vector<8xf32>
    %33 = vector.shape_cast %32 : vector<8xf32> to vector<8x1xf32>
    %34 = math.log %33 : vector<8x1xf32>
    %35 = arith.addf %34, %28 : vector<8x1xf32>
    %cst_11 = arith.constant 0.000000e+00 : f32
    %36 = vector.broadcast %cst_11 : f32 to vector<8x40xf32>
    %37 = arith.select %6, %26, %36 : vector<8x40xi1>, vector<8x40xf32>
    %cst_12 = arith.constant dense<0.000000e+00> : vector<8xf32>
    %38 = vector.multi_reduction <add>, %37, %cst_12 [1] : vector<8x40xf32> to vector<8xf32>
    %39 = vector.shape_cast %38 : vector<8xf32> to vector<8x1xf32>
    %40 = arith.subf %35, %39 : vector<8x1xf32>
    %cst_13 = arith.constant 5.000000e-01 : f32
    %41 = vector.broadcast %cst_13 : f32 to vector<8x1xf32>
    %42 = arith.mulf %41, %40 : vector<8x1xf32>
    %43 = arith.addf %25, %42 : vector<8x1xf32>
    %c0_14 = arith.constant 0 : index
    %c0_15 = arith.constant 0 : index
    %44 = vector.load %arg4[%c0_14, %c0_15] : memref<8x40xf32, #tpu.memory_space<vmem>>, vector<8x40xf32>
    %cst_16 = arith.constant dense<0xFF800000> : vector<8xf32>
    %45 = vector.multi_reduction <maximumf>, %44, %cst_16 [1] : vector<8x40xf32> to vector<8xf32>
    %46 = vector.shape_cast %45 : vector<8xf32> to vector<8x1xf32>
    %47 = vector.broadcast %46 : vector<8x1xf32> to vector<8x40xf32>
    %48 = arith.subf %44, %47 : vector<8x40xf32>
    %49 = math.exp %48 : vector<8x40xf32>
    %cst_17 = arith.constant dense<0.000000e+00> : vector<8xf32>
    %50 = vector.multi_reduction <add>, %49, %cst_17 [1] : vector<8x40xf32> to vector<8xf32>
    %51 = vector.shape_cast %50 : vector<8xf32> to vector<8x1xf32>
    %52 = math.log %51 : vector<8x1xf32>
    %53 = arith.addf %52, %46 : vector<8x1xf32>
    %cst_18 = arith.constant 0.000000e+00 : f32
    %54 = vector.broadcast %cst_18 : f32 to vector<8x40xf32>
    %55 = arith.select %6, %44, %54 : vector<8x40xi1>, vector<8x40xf32>
    %cst_19 = arith.constant dense<0.000000e+00> : vector<8xf32>
    %56 = vector.multi_reduction <add>, %55, %cst_19 [1] : vector<8x40xf32> to vector<8xf32>
    %57 = vector.shape_cast %56 : vector<8xf32> to vector<8x1xf32>
    %58 = arith.subf %53, %57 : vector<8x1xf32>
    %cst_20 = arith.constant 1.000000e+00 : f32
    %59 = vector.broadcast %cst_20 : f32 to vector<8x1xf32>
    %60 = arith.mulf %59, %58 : vector<8x1xf32>
    %61 = arith.addf %43, %60 : vector<8x1xf32>
    %62 = tpu.iota {dimensions = array<i32: 0>} : vector<8x1xi32>
    %c8_i32_21 = arith.constant 8 : i32
    %63 = arith.muli %arg0, %c8_i32_21 : i32
    %64 = vector.broadcast %63 : i32 to vector<8x1xi32>
    %65 = arith.addi %62, %64 : vector<8x1xi32>
    %c36_i32 = arith.constant 36 : i32
    %66 = vector.broadcast %c36_i32 : i32 to vector<8x1xi32>
    %67 = arith.cmpi slt, %65, %66 : vector<8x1xi32>
    %cst_22 = arith.constant 0.000000e+00 : f32
    %68 = vector.broadcast %cst_22 : f32 to vector<8x1xf32>
    %69 = arith.select %67, %61, %68 : vector<8x1xi1>, vector<8x1xf32>
    %70 = vector.shape_cast %69 : vector<8x1xf32> to vector<1x8x1xf32>
    %cst_23 = arith.constant dense<0.000000e+00> : vector<1xf32>
    %71 = vector.multi_reduction <add>, %70, %cst_23 [1, 2] : vector<1x8x1xf32> to vector<1xf32>
    %72 = vector.shape_cast %71 : vector<1xf32> to vector<1x1x1xf32>
    %73 = vector.extract %72[0, 0, 0] : f32 from vector<1x1x1xf32>
    %74 = vector.broadcast %73 : f32 to vector<8x128xf32>
    %c0_24 = arith.constant 0 : index
    %c0_25 = arith.constant 0 : index
    %c0_26 = arith.constant 0 : index
    %75 = vector.load %arg5[%c0_24, %c0_25, %c0_26] : memref<1x8x128xf32, #tpu.memory_space<vmem>>, vector<1x8x128xf32>
    %76 = vector.shape_cast %75 : vector<1x8x128xf32> to vector<8x128xf32>
    %77 = vector.shape_cast %74 : vector<8x128xf32> to vector<1x8x128xf32>
    tpu.vector_store %arg5[%c0_24, %c0_25, %c0_26], %77 {strides = array<i32>} : memref<1x8x128xf32, #tpu.memory_space<vmem>>, vector<1x8x128xf32>,
    return
  }
  func.func @transform_0(%arg0: i32) -> (i32, i32) {
    %c0_i32 = arith.constant 0 : i32
    %c0_i32_0 = arith.constant 0 : i32
    %c0_i32_1 = arith.constant 0 : i32
    return %c0_i32, %c0_i32_0 : i32, i32
  }
  func.func @transform_1(%arg0: i32) -> (i32, i32) {
    %c0_i32 = arith.constant 0 : i32
    %c0_i32_0 = arith.constant 0 : i32
    return %arg0, %c0_i32 : i32, i32
  }
  func.func @transform_2(%arg0: i32) -> (i32, i32) {
    %c0_i32 = arith.constant 0 : i32
    %c0_i32_0 = arith.constant 0 : i32
    return %arg0, %c0_i32 : i32, i32
  }
  func.func @transform_3(%arg0: i32) -> (i32, i32) {
    %c0_i32 = arith.constant 0 : i32
    %c0_i32_0 = arith.constant 0 : i32
    return %arg0, %c0_i32 : i32, i32
  }
  func.func @transform_4(%arg0: i32) -> (i32, i32, i32) {
    %c0_i32 = arith.constant 0 : i32
    %c0_i32_0 = arith.constant 0 : i32
    %c0_i32_1 = arith.constant 0 : i32
    return %arg0, %c0_i32, %c0_i32_0 : i32, i32, i32
  }
}

</mosaic_0001>

<llo_original>
// kernel: tpu_custom_call.1
$region0: #{tpu_custom_call.1}
  #allocation0 [shape = 'u32[]', space=smem, size = 0x4, offset = 0x4, fixed_abs, tag = 'smem constant byte address 0x4 - core index']
  #allocation1 [shape = 'u32[72,128]{1,0:T(1,128)}', space=vmem, size = 0x9000, scoped, tag = 'internal scratch']
  %s0 = inlined_call_operand.vmem [shape: s32[40,1], index: 0, kind: input, shape index: {}]
  %s1 = inlined_call_operand.vmem [shape: f32[36,40], index: 1, kind: input, shape index: {}]
  %s2 = inlined_call_operand.hbm [shape: f32[36,40], index: 2, kind: input, shape index: {}]
  %s3 = inlined_call_operand.hbm [shape: f32[36,40], index: 3, kind: input, shape index: {}]
  %s4 = inlined_call_operand.hbm [shape: f32[5,8,128], index: 4, kind: output, shape index: {}]
  %s5 = sld [smem:[#allocation0]]
  $region57: #{tpu_custom_call.1} parent=0
    _
  %s7 = ssub.s32 1, %s5
  %s8 = scalar_select 0, %s7, %s5
  $region1: #{tpu_custom_call.1} parent=0
    #allocation2 [shape = 'u8[8192]{0}', space=vmem, size = 0x2000, scoped, tag = 'input window, operand 2']
    #allocation3 [shape = 's32[2]{0}', space=sflag, size = 0x8, scoped, tag = 'scoped memory for tpu_custom_call.1']
    #allocation4 [shape = 's32[2]{0}', space=sflag, size = 0x8, scoped, tag = 'scoped memory for tpu_custom_call.1']
    #allocation5 [shape = 'u8[8192]{0}', space=vmem, size = 0x2000, scoped, tag = 'input window, operand 3']
    #allocation6 [shape = 's32[2]{0}', space=sflag, size = 0x8, scoped, tag = 'scoped memory for tpu_custom_call.1']
    #allocation7 [shape = 'u8[8192]{0}', space=vmem, size = 0x2000, scoped, tag = 'output window, operand 0']
    %9 = vsyncpa [#allocation3], 0
    %s10 = scalar_lea.sflag [#allocation3], 1
    %11 = vsyncpa %s10, 0
    %12 = vsyncpa [#allocation6], 0
    %s13 = scalar_lea.sflag [#allocation6], 1
    %14 = vsyncpa %s13, 0
    %15 = vsyncpa [#allocation4], 0
    %s16 = scalar_lea.sflag [#allocation4], 1
    %17 = vsyncpa %s16, 0
    loop: start=0, step=1, limit=7
    $region2: #{tpu_custom_call.1} parent=1 // loop_pre_header
      _
    $region3: #{tpu_custom_call.1} parent=1 // loop_header
      %s19 = sphi 0, %s23
      %p20 = scmp.ge.s32.totalorder %s19, 7
      %s27 = sphi 0, %s27
      %s29 = sphi 0, %s27
      %s30 = sphi 0, %s29
      %s44 = sphi 0, %s30
      %s50 = sphi 0, %s52
      %s53 = sphi 0, %s50
      %s54 = sphi 0, %s53
      %s70 = sphi 0, %s54
      %s76 = sphi 0, %s78
      %s79 = sphi 0, %s76
      %s80 = sphi 0, %s79
      %s96 = sphi 0, %s80
      %s102 = sphi 0, %s104
      %s105 = sphi 0, %s102
      %s106 = sphi 0, %s105
      %s122 = sphi 0, %s106
      %s128 = sphi 0, %s130
      %s131 = sphi 0, %s128
      %s132 = sphi 0, %s131
      %s148 = sphi 0, %s132
    $region4: #{tpu_custom_call.1} parent=1 // loop_header_branch
      %22 = sbr.rel (%p20) target = $region8
    $region5: #{tpu_custom_call.1} parent=1 // loop_body
      %s24 = ssub.s32 %s19, 1
      %s25 = ssub.s32 %s19, 2
      %s26 = sadd.s32 %s19, 1
      %s28 = sadd.s32 %s27, 1
      %p31 = scmp.eq.s32.totalorder %s19, 4
      %p32 = scmp.ne.s32.totalorder %s27, %s29
      %p33 = scmp.eq.s32.totalorder %s19, 0
      %p34 = por %p32, %p33
      %p35 = scmp.ne.s32.totalorder %s27, %s29
      %p36 = scmp.eq.s32.totalorder %s24, 4
      %p37 = por %p35, %p36
      %p38 = scmp.ne.s32.totalorder %s29, %s30
      %p39 = scmp.eq.s32.totalorder %s24, 0
      %p40 = por %p38, %p39
      %p41 = scmp.ne.s32.totalorder %s29, %s30
      %p42 = scmp.eq.s32.totalorder %s25, 4
      %p43 = por %p41, %p42
      %p45 = scmp.ne.s32.totalorder %s30, %s44
      %p46 = scmp.eq.s32.totalorder %s25, 0
      %p47 = por %p45, %p46
      %s48 = ssub.s32 %s19, %s26
      %p49 = scmp.eq.s32.totalorder %s48, 0
      %s51 = sadd.s32 %s50, 1
      %s52 = scalar_select %p49, %s50, %s51
      %p55 = pneg %p49
      %p56 = scmp.eq.s32.totalorder %s19, 4
      %p57 = por %p55, %p56
      %p58 = scmp.ne.s32.totalorder %s50, %s53
      %p59 = scmp.eq.s32.totalorder %s19, 0
      %p60 = por %p58, %p59
      %p61 = scmp.ne.s32.totalorder %s50, %s53
      %p62 = scmp.eq.s32.totalorder %s24, 4
      %p63 = por %p61, %p62
      %p64 = scmp.ne.s32.totalorder %s53, %s54
      %p65 = scmp.eq.s32.totalorder %s24, 0
      %p66 = por %p64, %p65
      %p67 = scmp.ne.s32.totalorder %s53, %s54
      %p68 = scmp.eq.s32.totalorder %s25, 4
      %p69 = por %p67, %p68
      %p71 = scmp.ne.s32.totalorder %s54, %s70
      %p72 = scmp.eq.s32.totalorder %s25, 0
      %p73 = por %p71, %p72
      %s74 = ssub.s32 %s19, %s26
      %p75 = scmp.eq.s32.totalorder %s74, 0
      %s77 = sadd.s32 %s76, 1
      %s78 = scalar_select %p75, %s76, %s77
      %p81 = pneg %p75
      %p82 = scmp.eq.s32.totalorder %s19, 4
      %p83 = por %p81, %p82
      %p84 = scmp.ne.s32.totalorder %s76, %s79
      %p85 = scmp.eq.s32.totalorder %s19, 0
      %p86 = por %p84, %p85
      %p87 = scmp.ne.s32.totalorder %s76, %s79
      %p88 = scmp.eq.s32.totalorder %s24, 4
      %p89 = por %p87, %p88
      %p90 = scmp.ne.s32.totalorder %s79, %s80
      %p91 = scmp.eq.s32.totalorder %s24, 0
      %p92 = por %p90, %p91
      %p93 = scmp.ne.s32.totalorder %s79, %s80
      %p94 = scmp.eq.s32.totalorder %s25, 4
      %p95 = por %p93, %p94
      %p97 = scmp.ne.s32.totalorder %s80, %s96
      %p98 = scmp.eq.s32.totalorder %s25, 0
      %p99 = por %p97, %p98
      %s100 = ssub.s32 %s19, %s26
      %p101 = scmp.eq.s32.totalorder %s100, 0
      %s103 = sadd.s32 %s102, 1
      %s104 = scalar_select %p101, %s102, %s103
      %p107 = pneg %p101
      %p108 = scmp.eq.s32.totalorder %s19, 4
      %p109 = por %p107, %p108
      %p110 = scmp.ne.s32.totalorder %s102, %s105
      %p111 = scmp.eq.s32.totalorder %s19, 0
      %p112 = por %p110, %p111
      %p113 = scmp.ne.s32.totalorder %s102, %s105
      %p114 = scmp.eq.s32.totalorder %s24, 4
      %p115 = por %p113, %p114
      %p116 = scmp.ne.s32.totalorder %s105, %s106
      %p117 = scmp.eq.s32.totalorder %s24, 0
      %p118 = por %p116, %p117
      %p119 = scmp.ne.s32.totalorder %s105, %s106
      %p120 = scmp.eq.s32.totalorder %s25, 4
      %p121 = por %p119, %p120
      %p123 = scmp.ne.s32.totalorder %s106, %s122
      %p124 = scmp.eq.s32.totalorder %s25, 0
      %p125 = por %p123, %p124
      %s126 = ssub.s32 %s19, %s26
      %p127 = scmp.eq.s32.totalorder %s126, 0
      %s129 = sadd.s32 %s128, 1
      %s130 = scalar_select %p127, %s128, %s129
      %p133 = pneg %p127
      %p134 = scmp.eq.s32.totalorder %s19, 4
      %p135 = por %p133, %p134
      %p136 = scmp.ne.s32.totalorder %s128, %s131
      %p137 = scmp.eq.s32.totalorder %s19, 0
      %p138 = por %p136, %p137
      %p139 = scmp.ne.s32.totalorder %s128, %s131
      %p140 = scmp.eq.s32.totalorder %s24, 4
      %p141 = por %p139, %p140
      %p142 = scmp.ne.s32.totalorder %s131, %s132
      %p143 = scmp.eq.s32.totalorder %s24, 0
      %p144 = por %p142, %p143
      %p145 = scmp.ne.s32.totalorder %s131, %s132
      %p146 = scmp.eq.s32.totalorder %s25, 4
      %p147 = por %p145, %p146
      %p149 = scmp.ne.s32.totalorder %s132, %s148
      %p150 = scmp.eq.s32.totalorder %s25, 0
      %p151 = por %p149, %p150
      %p152 = scmp.le.s32.totalorder 1, %s19
      %p153 = scmp.lt.s32.totalorder %s19, 6
      %p154 = pnand %p152, %p153
      %p155 = pneg %p154
      // Predicated region
      $region9: #{tpu_custom_call.1} parent=5 // pred_check
        _
      $region10: #{tpu_custom_call.1} parent=5 // pred_check_branch
        %157 = sbr.rel (%p154) target = $region12
      $region11: #{tpu_custom_call.1} parent=5 // pred_region
        %s158 = ssub.s32 %s19, 1
        // Predicated region
        $region13: #{tpu_custom_call.1} parent=11 // pred_check
          %p159 = pneg %p40
        $region14: #{tpu_custom_call.1} parent=11 // pred_check_branch
          %161 = sbr.rel (%p159) target = $region16
        $region15: #{tpu_custom_call.1} parent=11 // pred_region
          _
        $region16: #{tpu_custom_call.1} parent=11 // pred_fallthru
          _
      $region12: #{tpu_custom_call.1} parent=5 // pred_fallthru
        _
      %p162 = scmp.lt.s32.totalorder %s19, 5
      // Predicated region
      $region17: #{tpu_custom_call.1} parent=5 // pred_check
        %p163 = pneg %p162
      $region18: #{tpu_custom_call.1} parent=5 // pred_check_branch
        %165 = sbr.rel (%p163) target = $region20
      $region19: #{tpu_custom_call.1} parent=5 // pred_region
        // Predicated region
        $region21: #{tpu_custom_call.1} parent=19 // pred_check
          %p166 = pneg %p60
        $region22: #{tpu_custom_call.1} parent=19 // pred_check_branch
          %168 = sbr.rel (%p166) target = $region24
        $region23: #{tpu_custom_call.1} parent=19 // pred_region
          %p169 = scmp.lt.s32.totalorder %s19, 4
          %s170 = scalar_select %p169, %s19, 4
          %s171 = smul.addr %s170, 8
          %s172 = scalar_lea.vmem %s1, %s171
        $region24: #{tpu_custom_call.1} parent=19 // pred_fallthru
          _
        // Predicated region
        $region25: #{tpu_custom_call.1} parent=19 // pred_check
          %p173 = pneg %p86
        $region26: #{tpu_custom_call.1} parent=19 // pred_check_branch
          %175 = sbr.rel (%p173) target = $region28
        $region27: #{tpu_custom_call.1} parent=19 // pred_region
          %s176 = sand.u32 %s76, 1
          %s177 = scalar_lea.sflag [#allocation3], %s176
          %s178 = sand.u32 %s76, 1
          %s179 = smul.addr %s178, 8
          %s180 = scalar_lea.vmem [#allocation2], %s179
          %182 = vsyncadd %s177, 0
          %s183 = smul.addr %s19, 8
          %s184 = scalar_lea.hbm %s2, %s183
          %s186 = sshll.u32 %s184, 4
          %s187 = int_to_ptr.hbm [resolvable:$true] %s186
          %s188 = sshll.u32 %s180, 4
          %s189 = int_to_ptr.vmem [resolvable:$true] %s188
          %191 = dma.hbm_to_vmem [thread:$0]  %s187, 128, %s189, %s177
        $region28: #{tpu_custom_call.1} parent=19 // pred_fallthru
          _
        // Predicated region
        $region29: #{tpu_custom_call.1} parent=19 // pred_check
          %p192 = pneg %p112
        $region30: #{tpu_custom_call.1} parent=19 // pred_check_branch
          %194 = sbr.rel (%p192) target = $region32
        $region31: #{tpu_custom_call.1} parent=19 // pred_region
          %s195 = sand.u32 %s102, 1
          %s196 = scalar_lea.sflag [#allocation6], %s195
          %s197 = sand.u32 %s102, 1
          %s198 = smul.addr %s197, 8
          %s199 = scalar_lea.vmem [#allocation5], %s198
          %201 = vsyncadd %s196, 0
          %s202 = smul.addr %s19, 8
          %s203 = scalar_lea.hbm %s3, %s202
          %s205 = sshll.u32 %s203, 4
          %s206 = int_to_ptr.hbm [resolvable:$true] %s205
          %s207 = sshll.u32 %s199, 4
          %s208 = int_to_ptr.vmem [resolvable:$true] %s207
          %210 = dma.hbm_to_vmem [thread:$0]  %s206, 128, %s208, %s196
        $region32: #{tpu_custom_call.1} parent=19 // pred_fallthru
          _
      $region20: #{tpu_custom_call.1} parent=5 // pred_fallthru
        _
      %p211 = scmp.le.s32.totalorder 1, %s19
      %p212 = scmp.lt.s32.totalorder %s19, 6
      %p213 = pnand %p211, %p212
      %p214 = pneg %p213
      // Predicated region
      $region33: #{tpu_custom_call.1} parent=5 // pred_check
        _
      $region34: #{tpu_custom_call.1} parent=5 // pred_check_branch
        %216 = sbr.rel (%p213) target = $region36
      $region35: #{tpu_custom_call.1} parent=5 // pred_region
        %s217 = ssub.s32 %s19, 1
        %s218 = sand.u32 %s79, 1
        %s219 = scalar_lea.sflag [#allocation3], %s218
        %s220 = sand.u32 %s79, 1
        %s221 = smul.addr %s220, 8
        %s222 = scalar_lea.vmem [#allocation2], %s221
        // Predicated region
        $region37: #{tpu_custom_call.1} parent=35 // pred_check
          %p223 = pneg %p92
        $region38: #{tpu_custom_call.1} parent=35 // pred_check_branch
          %225 = sbr.rel (%p223) target = $region40
        $region39: #{tpu_custom_call.1} parent=35 // pred_region
          %227 = dma.done %s219, 128
        $region40: #{tpu_custom_call.1} parent=35 // pred_fallthru
          _
        %s228 = sand.u32 %s105, 1
        %s229 = scalar_lea.sflag [#allocation6], %s228
        %s230 = sand.u32 %s105, 1
        %s231 = smul.addr %s230, 8
        %s232 = scalar_lea.vmem [#allocation5], %s231
        // Predicated region
        $region41: #{tpu_custom_call.1} parent=35 // pred_check
          %p233 = pneg %p118
        $region42: #{tpu_custom_call.1} parent=35 // pred_check_branch
          %235 = sbr.rel (%p233) target = $region44
        $region43: #{tpu_custom_call.1} parent=35 // pred_region
          %237 = dma.done %s229, 128
        $region44: #{tpu_custom_call.1} parent=35 // pred_fallthru
          _
        %p238 = pneg %p40
        %p239 = pneg %p37
        %p240 = scmp.lt.s32.totalorder %s24, 4
        %s241 = scalar_select %p240, %s24, 4
        %s242 = smul.addr %s241, 8
        %s243 = scalar_lea.vmem %s1, %s242
        %p244 = pneg %p66
        %p245 = pneg %p63
        %s246 = sand.u32 %s79, 1
        %s247 = scalar_lea.sflag [#allocation3], %s246
        %s248 = sand.u32 %s79, 1
        %s249 = smul.addr %s248, 8
        %s250 = scalar_lea.vmem [#allocation2], %s249
        %p251 = pneg %p92
        %p252 = pneg %p89
        %s253 = sand.u32 %s105, 1
        %s254 = scalar_lea.sflag [#allocation6], %s253
        %s255 = sand.u32 %s105, 1
        %s256 = smul.addr %s255, 8
        %s257 = scalar_lea.vmem [#allocation5], %s256
        %p258 = pneg %p118
        %p259 = pneg %p115
        %p260 = pneg %p144
        %p261 = pneg %p141
        %s262 = sand.u32 %s131, 1
        %s263 = scalar_lea.sflag [#allocation4], %s262
        %s264 = sand.u32 %s131, 1
        %s265 = smul.addr %s264, 8
        %s266 = scalar_lea.vmem [#allocation7], %s265
        %p267 = scmp.lt.s32.totalorder %s24, 4
        %s268 = scalar_select %p267, %s24, 4
        %s269 = smul.addr %s268, 8
        %s270 = scalar_lea.vmem %s1, %s269
        %s271 = smul.u32 %s24, 8
        %s272 = scalar_lea.vmem %s0, %s271
        %v273 = vld [vmem:[%s272] sm:$0xff]
        %v274 = vlaneseq
        %v275 = vand.u32 %v274, 127
        %276 = vset.pattern.permute.xlu0 0
        %277 = vperm.xlu0 %276, %v273
        %v278 = vpop.permute.xlu0 %277
        %vm279 = vcmp.eq.s32.totalorder %v275, %v278
        %v280 = vld [vmem:[%s270] sm:$0xff]
        %vm281 = vcmask 326656
        %v282 = vsel %vm281, %v280, -inf
        %283 = vmax.xlane.f32.xlu0 %v282
        %v284 = vpop.xlane.xlu0 %283
        %v285 = vsub.f32 %v280, %v284
        %v286 = vmul.f32 %v285, 1.442695
        %v287 = vpow.pop %v286
        %v288 = vsel %vm281, %v287, 0.0
        %289 = vadd.xlane.f32.xlu0 %v288
        %v290 = vpop.xlane.xlu0 %289
        %v291 = vlog2.pop %v290
        %v292 = vmul.f32 %v291, 0.6931472
        %v293 = vadd.f32 %v292, %v284
        %v294 = vsel %vm279, %v280, 0.0
        %v295 = vsel %vm281, %v294, 0.0
        %296 = vadd.xlane.f32.xlu0 %v295
        %v297 = vpop.xlane.xlu0 %296
        %v298 = vsub.f32 %v293, %v297
        %v299 = vmul.f32 %v298, 0.25
        %v300 = vadd.f32 %v299, 0.0
        %v301 = vld [vmem:[%s222] sm:$0xff]
        %v302 = vsel %vm281, %v301, -inf
        %303 = vmax.xlane.f32.xlu0 %v302
        %v304 = vpop.xlane.xlu0 %303
        %v305 = vsub.f32 %v301, %v304
        %v306 = vmul.f32 %v305, 1.442695
        %v307 = vpow.pop %v306
        %v308 = vsel %vm281, %v307, 0.0
        %309 = vadd.xlane.f32.xlu0 %v308
        %v310 = vpop.xlane.xlu0 %309
        %v311 = vlog2.pop %v310
        %v312 = vmul.f32 %v311, 0.6931472
        %v313 = vadd.f32 %v312, %v304
        %v314 = vsel %vm279, %v301, 0.0
        %v315 = vsel %vm281, %v314, 0.0
        %316 = vadd.xlane.f32.xlu0 %v315
        %v317 = vpop.xlane.xlu0 %316
        %v318 = vsub.f32 %v313, %v317
        %v319 = vmul.f32 %v318, 0.5
        %v320 = vadd.f32 %v300, %v319
        %v321 = vld [vmem:[%s232] sm:$0xff]
        %v322 = vsel %vm281, %v321, -inf
        %323 = vmax.xlane.f32.xlu0 %v322
        %v324 = vpop.xlane.xlu0 %323
        %v325 = vsub.f32 %v321, %v324
        %v326 = vmul.f32 %v325, 1.442695
        %v327 = vpow.pop %v326
        %v328 = vsel %vm281, %v327, 0.0
        %329 = vadd.xlane.f32.xlu0 %v328
        %v330 = vpop.xlane.xlu0 %329
        %v331 = vlog2.pop %v330
        %v332 = vmul.f32 %v331, 0.6931472
        %v333 = vadd.f32 %v332, %v324
        %v334 = vsel %vm279, %v321, 0.0
        %v335 = vsel %vm281, %v334, 0.0
        %336 = vadd.xlane.f32.xlu0 %v335
        %v337 = vpop.xlane.xlu0 %336
        %v338 = vsub.f32 %v333, %v337
        %v339 = vadd.f32 %v320, %v338
        %v340 = vlaneseq
        %v341 = vshrl.u32 %v340, 7
        %v342 = vstv %s271
        %v343 = vadd.s32 %v341, %v342
        %vm344 = vcmp.lt.s32.totalorder %v343, 36
        %v345 = vsel %vm344, %v339, 0.0
        %vm346 = vcmask 7168
        %v347 = vsel %vm346, %v345, 0.0
        %348 = vadd.xlane.f32.xlu0 %v347
        %v349 = vpop.xlane.xlu0 %348
        %v350 = vrot.slane %v349, 4
        %v351 = vadd.f32 %v349, %v350
        %v352 = vrot.slane %v351, 2
        %v353 = vadd.f32 %v351, %v352
        %v354 = vrot.slane %v353, 1
        %v355 = vadd.f32 %v353, %v354
        %s356 = vtos %v355
        %v357 = vstv %s356
        %358 = vst [vmem:[%s266] sm:$0xff] %v357
        %s359 = sand.u32 %s131, 1
        %s360 = scalar_lea.sflag [#allocation4], %s359
        %s361 = sand.u32 %s131, 1
        %s362 = smul.addr %s361, 8
        %s363 = scalar_lea.vmem [#allocation7], %s362
        // Predicated region
        $region45: #{tpu_custom_call.1} parent=35 // pred_check
          %p364 = pneg %p141
        $region46: #{tpu_custom_call.1} parent=35 // pred_check_branch
          %366 = sbr.rel (%p364) target = $region48
        $region47: #{tpu_custom_call.1} parent=35 // pred_region
          %368 = vsyncadd %s360, 0
          %s369 = smul.addr %s24, 8
          %s370 = scalar_lea.hbm %s4, %s369
          %s372 = sshll.u32 %s363, 4
          %s373 = int_to_ptr.vmem [resolvable:$true] %s372
          %s374 = sshll.u32 %s370, 4
          %s375 = int_to_ptr.hbm [resolvable:$true] %s374
          %377 = dma.vmem_to_hbm [thread:$0]  %s373, 128, %s375, %s360
        $region48: #{tpu_custom_call.1} parent=35 // pred_fallthru
          _
      $region36: #{tpu_custom_call.1} parent=5 // pred_fallthru
        _
      %p378 = scmp.le.s32.totalorder 2, %s19
      // Predicated region
      $region49: #{tpu_custom_call.1} parent=5 // pred_check
        %p379 = pneg %p378
      $region50: #{tpu_custom_call.1} parent=5 // pred_check_branch
        %381 = sbr.rel (%p379) target = $region52
      $region51: #{tpu_custom_call.1} parent=5 // pred_region
        %s382 = ssub.s32 %s19, 2
        // Predicated region
        $region53: #{tpu_custom_call.1} parent=51 // pred_check
          %p383 = pneg %p147
        $region54: #{tpu_custom_call.1} parent=51 // pred_check_branch
          %385 = sbr.rel (%p383) target = $region56
        $region55: #{tpu_custom_call.1} parent=51 // pred_region
          %s386 = sand.u32 %s132, 1
          %s387 = scalar_lea.sflag [#allocation4], %s386
          %s388 = sand.u32 %s132, 1
          %s389 = smul.addr %s388, 8
          %s390 = scalar_lea.vmem [#allocation7], %s389
          %392 = dma.done %s387, 128
        $region56: #{tpu_custom_call.1} parent=51 // pred_fallthru
          _
      $region52: #{tpu_custom_call.1} parent=5 // pred_fallthru
        _
    $region6: #{tpu_custom_call.1} parent=1 // loop_footer
      %s23 = sadd.s32 1, %s19
    $region7: #{tpu_custom_call.1} parent=1 // loop_footer_branch
      %18 = sbr.rel target = $region3
    $region8: #{tpu_custom_call.1} parent=1 // loop_exit
      _
    %393 = vsyncpa [#allocation3], 1
    %s394 = scalar_lea.sflag [#allocation3], 1
    %395 = vsyncpa %s394, 1
    %396 = vsyncpa [#allocation6], 1
    %s397 = scalar_lea.sflag [#allocation6], 1
    %398 = vsyncpa %s397, 1
    %399 = vsyncpa [#allocation4], 1
    %s400 = scalar_lea.sflag [#allocation4], 1
    %401 = vsyncpa %s400, 1

</llo_original>
